<compile_context>
chip_gen: v7x
topology: tpu7x:2x2x1
jax: 0.10.0
libtpu: 0.0.40
codegen_flags: <defaults>
</compile_context>

<pallas_src>
import functools
import itertools

import numpy as np
import jax
import jax.numpy as jnp
from jax.experimental import pallas as pl
from jax.experimental.pallas import tpu as pltpu


@functools.lru_cache(maxsize=None)
def _make_weight(pack=2):
    """Block-diagonal cosine basis with alpha and the 0.25 scale folded in.

    W64[i, j] = 0.25 * alpha_flat[i] * cos_basis[i, j], so that
    out_row = x_row @ W64 + 128 reproduces the module's forward exactly.
    Returned as numpy so it constant-folds under jit (no per-call upload).

    TODO(synk): the upstream DiffJPEG dequantize stage (per-coefficient
    quant-table multiply) can be folded in here as diag(q_flat) @ W64 when
    the quant table is static, removing an entire elementwise HBM pass.
    """
    alpha = np.array([1.0 / np.sqrt(2)] + [1.0] * 7)
    alpha_flat = np.outer(alpha, alpha).reshape(64)
    tensor = np.zeros((8, 8, 8, 8), dtype=np.float64)
    for x, y, u, v in itertools.product(range(8), repeat=4):
        tensor[x, y, u, v] = (
            np.cos((2 * u + 1) * x * np.pi / 16)
            * np.cos((2 * v + 1) * y * np.pi / 16)
        )
    w64 = 0.25 * alpha_flat[:, None] * tensor.reshape(64, 64)

    lanes = 64 * pack
    w = np.zeros((lanes, lanes), dtype=np.float32)
    for p in range(pack):
        w[p * 64:(p + 1) * 64, p * 64:(p + 1) * 64] = w64
    return w


def _idct_kernel(x_ref, w_ref, o_ref):
    # x_ref: (tm, lanes) packed DCT coefficients
    # w_ref: (lanes, lanes) block-diagonal folded basis (VMEM-resident)
    # o_ref: (tm, lanes)
    o_ref[...] = (
        jnp.dot(x_ref[...], w_ref[...], preferred_element_type=jnp.float32)
        + 128.0
    ).astype(o_ref.dtype)


def _num_tensorcores():
    """Best-effort TensorCores-per-JAX-device (megacore) count."""
    try:
        kind = jax.devices()[0].device_kind.lower()
    except Exception:
        return 1
    if "lite" in kind or "v5e" in kind or "v6" in kind:
        return 1                      # v5e / v6e: single TensorCore
    if any(tag in kind for tag in ("v7", "v5p", "v4")):
        return 2                      # megacore chips: 2 TensorCores
    return 1                          # safe fallback


def _choose_tm(n_rows, tm_max, num_cores):
    """Row-tile size (packed rows): multiple of 8 (or full array if tiny)."""
    if n_rows <= 8:
        return n_rows                 # full-array block (divisibility exception)
    steps = pl.cdiv(n_rows, tm_max)
    if num_cores > 1:
        # Balanced multi-step grid so both TensorCores get near-equal work
        # and a ragged tail doesn't idle one core.
        steps = max(steps, 2 * num_cores)
        steps = pl.cdiv(steps, num_cores) * num_cores
    tm = pl.cdiv(n_rows, steps)
    tm = max(8, pl.cdiv(tm, 8) * 8)
    return min(tm, tm_max)


@functools.partial(jax.jit, static_argnames=("pack", "tm_max", "num_cores"))
def _idct_impl(image, *, pack, tm_max, num_cores):
    B = image.shape[0]
    lanes = 64 * pack
    # NOTE: keeping DiffJPEG block data in a flat lane-dense (N, 64*pack)
    # layout across the whole pipeline would avoid these relayout reshapes;
    # they are kept here to preserve the module's (B, 8, 8) interface.
    x_flat = image.reshape(B, 64)

    rem = B % pack
    b_main = B - rem
    pieces = []

    if b_main:
        w = jnp.asarray(_make_weight(pack))
        n_rows = b_main // pack
        x_packed = x_flat[:b_main].reshape(n_rows, lanes)

        tm = _choose_tm(n_rows, tm_max, num_cores)
        grid = pl.cdiv(n_rows, tm)

        cost = pl.CostEstimate(
            flops=2 * n_rows * lanes * lanes,
            transcendentals=0,
            bytes_accessed=(2 * n_rows * lanes + lanes * lanes) * 4,
        )

        out_packed = pl.pallas_call(
            _idct_kernel,
            out_shape=jax.ShapeDtypeStruct((n_rows, lanes), jnp.float32),
            grid_spec=pltpu.PrefetchScalarGridSpec(
                num_scalar_prefetch=0,
                grid=(grid,),
                in_specs=[
                    pl.BlockSpec((tm, lanes), lambda i: (i, 0)),
                    pl.BlockSpec((lanes, lanes), lambda i: (0, 0)),  # resident
                ],
                out_specs=pl.BlockSpec((tm, lanes), lambda i: (i, 0)),
            ),
            compiler_params=pltpu.CompilerParams(
                dimension_semantics=("parallel",),
                vmem_limit_bytes=32 * 1024 * 1024,
            ),
            cost_estimate=cost,
        )(x_packed, w)
        pieces.append(out_packed.reshape(b_main, 64))

    if rem:
        # Leftover (< pack) 8x8 blocks: tiny separate call, no full-array pad.
        w64 = jnp.asarray(_make_weight(1))
        x_tail = x_flat[b_main:]                       # (rem, 64)
        tail = pl.pallas_call(
            _idct_kernel,
            out_shape=jax.ShapeDtypeStruct((rem, 64), jnp.float32),
        )(x_tail, w64)
        pieces.append(tail)

    out_flat = pieces[0] if len(pieces) == 1 else jnp.concatenate(pieces, axis=0)
    return out_flat.reshape(B, 8, 8)


def idct_8x8(image, *, pack=2, tm_max=8192):
    """image: (B, 8, 8) float32 -> (B, 8, 8) float32."""
    assert image.shape[1:] == (8, 8)
    return _idct_impl(image, pack=pack, tm_max=tm_max,
                      num_cores=_num_tensorcores())


def _reference(image):
    """Pure-JAX reference matching the PyTorch forward exactly."""
    alpha = np.array([1.0 / np.sqrt(2)] + [1.0] * 7)
    alpha_mat = jnp.asarray(np.outer(alpha, alpha).astype(np.float32))
    tensor = np.zeros((8, 8, 8, 8), dtype=np.float32)
    for x, y, u, v in itertools.product(range(8), repeat=4):
        tensor[x, y, u, v] = (
            np.cos((2 * u + 1) * x * np.pi / 16)
            * np.cos((2 * v + 1) * y * np.pi / 16)
        )
    t = jnp.asarray(tensor)
    scaled = image * alpha_mat
    return 0.25 * jnp.tensordot(scaled, t, axes=2) + 128.0


if __name__ == "__main__":
    # batch of 8x8 DCT-coefficient blocks
    x = jax.random.normal(jax.random.PRNGKey(0), (32, 8, 8),
                          dtype=jnp.float32) * 50.0
    out = jax.block_until_ready(idct_8x8(x))
    ref = jax.block_until_ready(_reference(x))
    np.testing.assert_allclose(np.asarray(out), np.asarray(ref),
                               rtol=1e-5, atol=1e-3)

    # odd batch exercises the leftover-block (no full pad) path
    x2 = jax.random.normal(jax.random.PRNGKey(1), (7, 8, 8),
                           dtype=jnp.float32) * 50.0
    out2 = jax.block_until_ready(idct_8x8(x2))
    ref2 = jax.block_until_ready(_reference(x2))
    np.testing.assert_allclose(np.asarray(out2), np.asarray(ref2),
                               rtol=1e-5, atol=1e-3)

    print("KERNEL_OK")
</pallas_src>

<mosaic_0001>
module attributes {stable_mosaic.version = 11 : i64} {
  func.func @_idct_kernel(%arg0: i32, %arg1: memref<16x128xf32, #tpu.memory_space<vmem>>, %arg2: memref<128x128xf32, #tpu.memory_space<vmem>>, %arg3: memref<16x128xf32, #tpu.memory_space<vmem>>) attributes {dimension_semantics = [#tpu.dimension_semantics<parallel>], iteration_bounds = array<i64: 1>, scalar_prefetch = 0 : i64, scratch_operands = 0 : i64, tpu.core_type = #tpu.core_type<tc>, window_params = [{transform_indices = @transform_0, window_bounds = array<i64: 16, 128>}, {pipeline_mode = #tpu.pipeline_mode<synchronous>, transform_indices = @transform_1, window_bounds = array<i64: 128, 128>}, {transform_indices = @transform_2, window_bounds = array<i64: 16, 128>}]} {
    %c0 = arith.constant 0 : index
    %c0_0 = arith.constant 0 : index
    %0 = vector.load %arg1[%c0, %c0_0] : memref<16x128xf32, #tpu.memory_space<vmem>>, vector<16x128xf32>
    %c0_1 = arith.constant 0 : index
    %c0_2 = arith.constant 0 : index
    %1 = vector.load %arg2[%c0_1, %c0_2] : memref<128x128xf32, #tpu.memory_space<vmem>>, vector<128x128xf32>
    %cst = arith.constant dense<0.000000e+00> : vector<16x128xf32>
    %2 = tpu.matmul %0, %1, %cst {dimension_numbers = #tpu.dot_dimension_numbers<[1], [0], [0], [1], [0, 0, 1, 1], [], []>} : vector<16x128xf32>, vector<128x128xf32>, vector<16x128xf32> -> vector<16x128xf32>
    %cst_3 = arith.constant 1.280000e+02 : f32
    %3 = vector.broadcast %cst_3 : f32 to vector<16x128xf32>
    %4 = arith.addf %2, %3 : vector<16x128xf32>
    %c0_4 = arith.constant 0 : index
    %c0_5 = arith.constant 0 : index
    %5 = vector.load %arg3[%c0_4, %c0_5] : memref<16x128xf32, #tpu.memory_space<vmem>>, vector<16x128xf32>
    tpu.vector_store %arg3[%c0_4, %c0_5], %4 {strides = array<i32>} : memref<16x128xf32, #tpu.memory_space<vmem>>, vector<16x128xf32>,
    return
  }
  func.func @transform_0(%arg0: i32) -> (i32, i32) {
    %c0_i32 = arith.constant 0 : i32
    %c0_i32_0 = arith.constant 0 : i32
    return %arg0, %c0_i32 : i32, i32
  }
  func.func @transform_1(%arg0: i32) -> (i32, i32) {
    %c0_i32 = arith.constant 0 : i32
    %c0_i32_0 = arith.constant 0 : i32
    %c0_i32_1 = arith.constant 0 : i32
    return %c0_i32, %c0_i32_0 : i32, i32
  }
  func.func @transform_2(%arg0: i32) -> (i32, i32) {
    %c0_i32 = arith.constant 0 : i32
    %c0_i32_0 = arith.constant 0 : i32
    return %arg0, %c0_i32 : i32, i32
  }
}

</mosaic_0001>

<llo_original>
// kernel: _idct_impl.1
$region0: #{_idct_impl.1}
  #allocation0 [shape = 'u32[]', space=smem, size = 0x4, offset = 0x4, fixed_abs, tag = 'smem constant byte address 0x4 - core index']
  #allocation1 [shape = 'u32[144,128]{1,0:T(1,128)}', space=vmem, size = 0x12000, scoped, tag = 'internal scratch']
  %s0 = inlined_call_operand.vmem [shape: f32[16,128], index: 0, kind: input, shape index: {}]
  %s1 = inlined_call_operand.vmem [shape: f32[128,128], index: 1, kind: input, shape index: {}]
  %s2 = inlined_call_operand.vmem [shape: f32[16,128], index: 2, kind: output, shape index: {}]
  %s3 = sld [smem:[#allocation0]]
  $region18: #{_idct_impl.1} parent=0
    _
  %s5 = ssub.s32 1, %s3
  %s6 = scalar_select 0, %s5, %s3
  // Predicated region
  $region2: #{_idct_impl.1} parent=0 // pred_check
    _
  $region3: #{_idct_impl.1} parent=0 // pred_check_branch
    %8 = sbr.rel (0) target = $region5
  $region4: #{_idct_impl.1} parent=0 // pred_region
    _
  $region5: #{_idct_impl.1} parent=0 // pred_fallthru
    _
  // Predicated region
  $region6: #{_idct_impl.1} parent=0 // pred_check
    _
  $region7: #{_idct_impl.1} parent=0 // pred_check_branch
    %10 = sbr.rel (0) target = $region9
  $region8: #{_idct_impl.1} parent=0 // pred_region
    _
  $region9: #{_idct_impl.1} parent=0 // pred_fallthru
    _
  %v11 = vld [vmem:[%s0] sm:$0xff]
  %v12 = vld [vmem:[%s0 + $0x8] sm:$0xff]
  %v13 = vld [vmem:[%s1] sm:$0xff]
  %v14 = vld [vmem:[%s1 + $0x8] sm:$0xff]
  %v15 = vld [vmem:[%s1 + $0x10] sm:$0xff]
  %v16 = vld [vmem:[%s1 + $0x18] sm:$0xff]
  %v17 = vld [vmem:[%s1 + $0x20] sm:$0xff]
  %v18 = vld [vmem:[%s1 + $0x28] sm:$0xff]
  %v19 = vld [vmem:[%s1 + $0x30] sm:$0xff]
  %v20 = vld [vmem:[%s1 + $0x38] sm:$0xff]
  %v21 = vld [vmem:[%s1 + $0x40] sm:$0xff]
  %v22 = vld [vmem:[%s1 + $0x48] sm:$0xff]
  %v23 = vld [vmem:[%s1 + $0x50] sm:$0xff]
  %v24 = vld [vmem:[%s1 + $0x58] sm:$0xff]
  %v25 = vld [vmem:[%s1 + $0x60] sm:$0xff]
  %v26 = vld [vmem:[%s1 + $0x68] sm:$0xff]
  %v27 = vld [vmem:[%s1 + $0x70] sm:$0xff]
  %v28 = vld [vmem:[%s1 + $0x78] sm:$0xff]
  %29 = vmatprep.subr.mxu0 0.0
  %30 = vmatpush1.msra.mxu0 %v13
  %31 = vmatprep.subr.mxu0 0.0
  %32 = vmatpush1.msra.mxu0 %v14
  %33 = vmatprep.subr.mxu0 0.0
  %34 = vmatpush1.msra.mxu0 %v15
  %35 = vmatprep.subr.mxu0 0.0
  %36 = vmatpush1.msra.mxu0 %v16
  %37 = vmatprep.subr.mxu0 0.0
  %38 = vmatpush1.msra.mxu0 %v17
  %39 = vmatprep.subr.mxu0 0.0
  %40 = vmatpush1.msra.mxu0 %v18
  %41 = vmatprep.subr.mxu0 0.0
  %42 = vmatpush1.msra.mxu0 %v19
  %43 = vmatprep.subr.mxu0 0.0
  %44 = vmatpush1.msra.mxu0 %v20
  %45 = vmatprep.subr.mxu0 0.0
  %46 = vmatpush1.msra.mxu0 %v21
  %47 = vmatprep.subr.mxu0 0.0
  %48 = vmatpush1.msra.mxu0 %v22
  %49 = vmatprep.subr.mxu0 0.0
  %50 = vmatpush1.msra.mxu0 %v23
  %51 = vmatprep.subr.mxu0 0.0
  %52 = vmatpush1.msra.mxu0 %v24
  %53 = vmatprep.subr.mxu0 0.0
  %54 = vmatpush1.msra.mxu0 %v25
  %55 = vmatprep.subr.mxu0 0.0
  %56 = vmatpush1.msra.mxu0 %v26
  %57 = vmatprep.subr.mxu0 0.0
  %58 = vmatpush1.msra.mxu0 %v27
  %59 = vmatprep.subr.mxu0 0.0
  %60 = vmatpush1.msra.mxu0 %v28
  %61 = vmatprep.subr.mxu0 0.0
  %62 = vmatpush1.msra.mxu0 0.0
  %63 = vmatprep.subr.mxu0 0.0
  %64 = vmatpush1.msra.mxu0 0.0
  %65 = vmatprep.subr.mxu0 0.0
  %66 = vmatpush1.msra.mxu0 0.0
  %67 = vmatprep.subr.mxu0 0.0
  %68 = vmatpush1.msra.mxu0 0.0
  %69 = vmatprep.subr.mxu0 0.0
  %70 = vmatpush1.msra.mxu0 0.0
  %71 = vmatprep.subr.mxu0 0.0
  %72 = vmatpush1.msra.mxu0 0.0
  %73 = vmatprep.subr.mxu0 0.0
  %74 = vmatpush1.msra.mxu0 0.0
  %75 = vmatprep.subr.mxu0 0.0
  %76 = vmatpush1.msra.mxu0 0.0
  %77 = vmatprep.subr.mxu0 0.0
  %78 = vmatpush1.msra.mxu0 0.0
  %79 = vmatprep.subr.mxu0 0.0
  %80 = vmatpush1.msra.mxu0 0.0
  %81 = vmatprep.subr.mxu0 0.0
  %82 = vmatpush1.msra.mxu0 0.0
  %83 = vmatprep.subr.mxu0 0.0
  %84 = vmatpush1.msra.mxu0 0.0
  %85 = vmatprep.subr.mxu0 0.0
  %86 = vmatpush1.msra.mxu0 0.0
  %87 = vmatprep.subr.mxu0 0.0
  %88 = vmatpush1.msra.mxu0 0.0
  %89 = vmatprep.subr.mxu0 0.0
  %90 = vmatpush1.msra.mxu0 0.0
  %91 = vmatprep.subr.mxu0 0.0
  %92 = vmatpush1.msra.mxu0 0.0
  %93 = vmatprep.mubr.f32.mxu0 0.0
  %94 = vmatmul.mubr.f32.gmra.mrb[0].mxu0 %v11
  %v95 = vpop.f32.mrb[0].mxu0
  %v96 = vadd.f32 128.0, %v95
  %v97 = vpop.f32.mrb[0].mxu0
  %98 = vmatprep.mubr.f32.mxu0 0.0
  %99 = vmatmul.mubr.f32.gmra.mrb[0].mxu0 %v12
  %v100 = vpop.f32.mrb[0].mxu0
  %v101 = vadd.f32 128.0, %v100
  %v102 = vpop.f32.mrb[0].mxu0
  %103 = vdwg.mxu0
  %104 = vst [vmem:[%s2] sm:$0xff] %v96
  %105 = vst [vmem:[%s2 + $0x8] sm:$0xff] %v101
  // Predicated region
  $region10: #{_idct_impl.1} parent=0 // pred_check
    _
  $region11: #{_idct_impl.1} parent=0 // pred_check_branch
    %107 = sbr.rel (0) target = $region13
  $region12: #{_idct_impl.1} parent=0 // pred_region
    _
  $region13: #{_idct_impl.1} parent=0 // pred_fallthru
    _
  // Predicated region
  $region14: #{_idct_impl.1} parent=0 // pred_check
    _
  $region15: #{_idct_impl.1} parent=0 // pred_check_branch
    %109 = sbr.rel (0) target = $region17
  $region16: #{_idct_impl.1} parent=0 // pred_region
    _
  $region17: #{_idct_impl.1} parent=0 // pred_fallthru
    _

</llo_original>
